<compile_context>
chip_gen: v6e
topology: v6e:2x2x1
jax: 0.10.0
libtpu: 0.0.40
codegen_flags: <defaults>
</compile_context>

<pallas_src>
import functools

import jax
import jax.numpy as jnp
from jax.experimental import pallas as pl
from jax.experimental.pallas import tpu as pltpu

NIN, NOUT = 8, 11
KH, KW = 7, 1
SH, SW = 4, 1
PH, PW = 3, 0
BN_EPS = 1e-5


def _conv_bn_relu_kernel(x_ref, w_ref, shift_ref, o_ref, xpad_ref, *,
                         ho_count, tile_ho):
    # x_ref:     (H*CI, NW)         input, rows h-major/ci-minor, cols (n, w)
    # w_ref:     (CO, KH*CI)        BN-scale-folded weight, k-major/ci-minor
    # shift_ref: (CO, 1)            BN shift = scale*(bias - mean) + beta
    # o_ref:     (tile_ho, CO, NW)  output tile for this grid step
    # xpad_ref:  ((H+2*PH)*CI, NW)  VMEM scratch: H-zero-padded input slab
    ci = NIN
    co, nw = o_ref.shape[1], o_ref.shape[2]
    h_rows = x_ref.shape[0]          # H * CI
    pad_rows = PH * ci               # 24 rows (multiple of 8 -> sublane aligned)

    t = pl.program_id(0)

    # Build the padded slab once.  The grid axis is sequential ("arbitrary") and
    # the input block is resident across steps, so step 0 sees the data and all
    # later HO tiles reuse the slab.  This replaces the jnp.pad HBM round-trip
    # with a cheap VMEM->VMEM copy.
    @pl.when(t == 0)
    def _():
        xpad_ref[:pad_rows, :] = jnp.zeros((pad_rows, nw), jnp.float32)
        xpad_ref[pad_rows + h_rows:, :] = jnp.zeros((pad_rows, nw), jnp.float32)
        xpad_ref[pad_rows:pad_rows + h_rows, :] = x_ref[...]

    # Hoisted once per grid step (JAX does not CSE broadcasts inside the loop).
    w = w_ref[...]                                        # (CO, KH*CI)
    shift_b = jnp.broadcast_to(shift_ref[...], (co, nw))  # (CO, NW)

    ragged = (ho_count % tile_ho) != 0

    def compute_row(i):
        ho = t * tile_ho + i
        # Slab start = ho*SH*CI is a multiple of 32 -> sublane aligned.
        start = pl.multiple_of(ho * (SH * ci), 8)
        slab = xpad_ref[pl.ds(start, KH * ci), :]         # (KH*CI, NW): all 7 taps
        acc = jnp.dot(w, slab, preferred_element_type=jnp.float32)  # one MXU push
        # Contiguous (CO, NW) sub-block store (lane-dense, ~2 vst per row).
        o_ref[i] = jnp.maximum(acc + shift_b, 0.0).astype(o_ref.dtype)

    # Small bounded unroll inside a tile; large HO is tiled on the grid axis.
    for i in range(tile_ho):
        if ragged:
            pl.when(t * tile_ho + i < ho_count)(functools.partial(compute_row, i))
        else:
            compute_row(i)


@jax.jit
def conv2d_bn_relu(x, w, b, gamma, beta, running_mean, running_var):
    """x: (N, CI, H, W) float32 -> (N, CO, HO, W) float32 (eval-mode BN + ReLU)."""
    n, ci, h, wd = x.shape
    assert ci == NIN
    ho = (h + 2 * PH - KH) // SH + 1
    nw = n * wd

    # --- glue / layout plumbing (one relayout pass over x, NO pad pass) ---
    # (N, CI, H, W) -> (H, CI, N, W) -> (H*CI, N*W): rows are h-major/ci-minor so
    # the 7-tap window of one output row is a single contiguous (KH*CI, N*W)
    # slab; columns fold the batch onto the lane axis for lane-dense matmuls.
    x_r = jnp.transpose(x, (2, 1, 0, 3)).reshape(h * ci, nw)

    # (CO, CI, KH, 1) -> (CO, KH, CI) -> (CO, KH*CI); fold BN scale into the
    # (tiny) weight, fold conv bias + BN mean/beta into a per-channel shift.
    inv_std = 1.0 / jnp.sqrt(running_var + BN_EPS)
    scale = (gamma * inv_std).astype(jnp.float32)
    w_f = (jnp.transpose(w[..., 0], (0, 2, 1)).reshape(NOUT, KH * ci)
           * scale[:, None]).astype(jnp.float32)
    shift = (scale * (b - running_mean) + beta).reshape(NOUT, 1).astype(jnp.float32)

    tile_ho = min(ho, 8)
    n_tiles = pl.cdiv(ho, tile_ho)
    kernel = functools.partial(_conv_bn_relu_kernel, ho_count=ho, tile_ho=tile_ho)

    out_k = pl.pallas_call(
        kernel,
        out_shape=jax.ShapeDtypeStruct((ho, NOUT, nw), jnp.float32),
        grid_spec=pltpu.PrefetchScalarGridSpec(
            num_scalar_prefetch=0,
            grid=(n_tiles,),
            in_specs=[
                pl.BlockSpec((h * ci, nw), lambda t: (0, 0)),       # resident input
                pl.BlockSpec((NOUT, KH * ci), lambda t: (0, 0)),    # folded weight
                pl.BlockSpec((NOUT, 1), lambda t: (0, 0)),          # BN shift
            ],
            out_specs=pl.BlockSpec((tile_ho, NOUT, nw), lambda t: (t, 0, 0)),
            scratch_shapes=[pltpu.VMEM(((h + 2 * PH) * ci, nw), jnp.float32)],
        ),
        compiler_params=pltpu.CompilerParams(
            # Sequential: the halo slab is built on step 0 and reused.
            dimension_semantics=("arbitrary",),
            # Raise v5e's 16 MiB scoped-VMEM default; well inside v7x's 64 MiB.
            vmem_limit_bytes=32 * 1024 * 1024,
        ),
    )(x_r, w_f, shift)

    # (HO, CO, N*W) -> (N, CO, HO, W)
    return jnp.transpose(out_k.reshape(ho, NOUT, n, wd), (2, 1, 0, 3))


def _reference(x, w, b, gamma, beta, running_mean, running_var):
    y = jax.lax.conv_general_dilated(
        x, w, window_strides=(SH, SW), padding=((PH, PH), (PW, PW)),
        dimension_numbers=("NCHW", "OIHW", "NCHW"))
    y = y + b.reshape(1, -1, 1, 1)
    y = (y - running_mean.reshape(1, -1, 1, 1)) / jnp.sqrt(
        running_var.reshape(1, -1, 1, 1) + BN_EPS)
    y = gamma.reshape(1, -1, 1, 1) * y + beta.reshape(1, -1, 1, 1)
    return jnp.maximum(y, 0.0)


if __name__ == "__main__":
    key = jax.random.PRNGKey(0)
    kx, kw, kb, kg, kbt, km, kv = jax.random.split(key, 7)

    # N*W = 128 -> the kernel's lane axis is a full lane tile.
    N, H, W = 2, 16, 64
    x = jax.random.normal(kx, (N, NIN, H, W), jnp.float32)

    # Deterministic parameters (PyTorch-default-style conv init, non-trivial BN
    # eval-mode statistics so the scale/shift folding is actually exercised).
    fan_in = NIN * KH * KW
    bound = float(1.0 / (fan_in ** 0.5))
    w = jax.random.uniform(kw, (NOUT, NIN, KH, KW), jnp.float32, -bound, bound)
    b = jax.random.uniform(kb, (NOUT,), jnp.float32, -bound, bound)
    gamma = jax.random.uniform(kg, (NOUT,), jnp.float32, 0.5, 1.5)
    beta = 0.1 * jax.random.normal(kbt, (NOUT,), jnp.float32)
    running_mean = 0.1 * jax.random.normal(km, (NOUT,), jnp.float32)
    running_var = jax.random.uniform(kv, (NOUT,), jnp.float32, 0.5, 1.5)

    out = conv2d_bn_relu(x, w, b, gamma, beta, running_mean, running_var)
    out = jax.block_until_ready(out)

    ref = _reference(x, w, b, gamma, beta, running_mean, running_var)
    assert out.shape == (N, NOUT, (H + 2 * PH - KH) // SH + 1, W), out.shape
    assert jnp.allclose(out, ref, atol=1e-4, rtol=1e-4), "mismatch vs reference"
    print("KERNEL_OK")
</pallas_src>

<mosaic_0001>
module attributes {stable_mosaic.version = 11 : i64} {
  func.func @_conv_bn_relu_kernel(%arg0: i32, %arg1: memref<128x128xf32, #tpu.memory_space<vmem>>, %arg2: memref<11x56xf32, #tpu.memory_space<vmem>>, %arg3: memref<11x1xf32, #tpu.memory_space<vmem>>, %arg4: memref<4x11x128xf32, #tpu.memory_space<vmem>>, %arg5: memref<176x128xf32, #tpu.memory_space<vmem>>) attributes {dimension_semantics = [#tpu.dimension_semantics<arbitrary>], iteration_bounds = array<i64: 1>, scalar_prefetch = 0 : i64, scratch_operands = 1 : i64, tpu.core_type = #tpu.core_type<tc>, window_params = [{pipeline_mode = #tpu.pipeline_mode<synchronous>, transform_indices = @transform_0, window_bounds = array<i64: 128, 128>}, {pipeline_mode = #tpu.pipeline_mode<synchronous>, transform_indices = @transform_1, window_bounds = array<i64: 11, 56>}, {pipeline_mode = #tpu.pipeline_mode<synchronous>, transform_indices = @transform_2, window_bounds = array<i64: 11, 1>}, {transform_indices = @transform_3, window_bounds = array<i64: 4, 11, 128>}]} {
    %c0_i32 = arith.constant 0 : i32
    %0 = arith.cmpi eq, %arg0, %c0_i32 : i32
    %1 = arith.extui %0 : i1 to i32
    %c0_i32_0 = arith.constant 0 : i32
    %2 = arith.cmpi ne, %1, %c0_i32_0 : i32
    scf.if %2 {
      %cst_31 = arith.constant 0.000000e+00 : f32
      %59 = vector.broadcast %cst_31 : f32 to vector<24x128xf32>
      %c0_32 = arith.constant 0 : index
      %c0_33 = arith.constant 0 : index
      %60 = vector.load %arg5[%c0_32, %c0_33] : memref<176x128xf32, #tpu.memory_space<vmem>>, vector<24x128xf32>
      tpu.vector_store %arg5[%c0_32, %c0_33], %59 {strides = array<i32>} : memref<176x128xf32, #tpu.memory_space<vmem>>, vector<24x128xf32>,
      %cst_34 = arith.constant 0.000000e+00 : f32
      %61 = vector.broadcast %cst_34 : f32 to vector<24x128xf32>
      %c152 = arith.constant 152 : index
      %c0_35 = arith.constant 0 : index
      %62 = vector.load %arg5[%c152, %c0_35] : memref<176x128xf32, #tpu.memory_space<vmem>>, vector<24x128xf32>
      tpu.vector_store %arg5[%c152, %c0_35], %61 {strides = array<i32>} : memref<176x128xf32, #tpu.memory_space<vmem>>, vector<24x128xf32>,
      %c0_36 = arith.constant 0 : index
      %c0_37 = arith.constant 0 : index
      %63 = vector.load %arg1[%c0_36, %c0_37] : memref<128x128xf32, #tpu.memory_space<vmem>>, vector<128x128xf32>
      %c24 = arith.constant 24 : index
      %c0_38 = arith.constant 0 : index
      %64 = vector.load %arg5[%c24, %c0_38] : memref<176x128xf32, #tpu.memory_space<vmem>>, vector<128x128xf32>
      tpu.vector_store %arg5[%c24, %c0_38], %63 {strides = array<i32>} : memref<176x128xf32, #tpu.memory_space<vmem>>, vector<128x128xf32>,
    } else {
    }
    %c0 = arith.constant 0 : index
    %c0_1 = arith.constant 0 : index
    %3 = vector.load %arg2[%c0, %c0_1] : memref<11x56xf32, #tpu.memory_space<vmem>>, vector<11x56xf32>
    %c0_2 = arith.constant 0 : index
    %c0_3 = arith.constant 0 : index
    %4 = vector.load %arg3[%c0_2, %c0_3] : memref<11x1xf32, #tpu.memory_space<vmem>>, vector<11x1xf32>
    %5 = vector.shape_cast %4 : vector<11x1xf32> to vector<11x1xf32>
    %6 = vector.broadcast %5 : vector<11x1xf32> to vector<11x128xf32>
    %c4_i32 = arith.constant 4 : i32
    %7 = arith.muli %arg0, %c4_i32 : i32
    %c0_i32_4 = arith.constant 0 : i32
    %8 = arith.addi %7, %c0_i32_4 : i32
    %c32_i32 = arith.constant 32 : i32
    %9 = arith.muli %8, %c32_i32 : i32
    %10 = tpu.assume_multiple %9, 8 : i32
    %11 = arith.index_cast %10 : i32 to index
    %c0_5 = arith.constant 0 : index
    %12 = vector.load %arg5[%11, %c0_5] : memref<176x128xf32, #tpu.memory_space<vmem>>, vector<56x128xf32>
    %cst = arith.constant dense<0.000000e+00> : vector<11x128xf32>
    %13 = tpu.matmul %3, %12, %cst {dimension_numbers = #tpu.dot_dimension_numbers<[1], [0], [0], [1], [0, 0, 1, 1], [], []>} : vector<11x56xf32>, vector<56x128xf32>, vector<11x128xf32> -> vector<11x128xf32>
    %14 = arith.addf %13, %6 : vector<11x128xf32>
    %cst_6 = arith.constant 0.000000e+00 : f32
    %15 = vector.broadcast %cst_6 : f32 to vector<11x128xf32>
    %16 = arith.maximumf %14, %15 : vector<11x128xf32>
    %c0_7 = arith.constant 0 : index
    %c0_8 = arith.constant 0 : index
    %c0_9 = arith.constant 0 : index
    %17 = vector.load %arg4[%c0_7, %c0_8, %c0_9] : memref<4x11x128xf32, #tpu.memory_space<vmem>>, vector<1x11x128xf32>
    %18 = vector.shape_cast %17 : vector<1x11x128xf32> to vector<11x128xf32>
    %19 = vector.shape_cast %16 : vector<11x128xf32> to vector<1x11x128xf32>
    tpu.vector_store %arg4[%c0_7, %c0_8, %c0_9], %19 {strides = array<i32>} : memref<4x11x128xf32, #tpu.memory_space<vmem>>, vector<1x11x128xf32>,
    %c4_i32_10 = arith.constant 4 : i32
    %20 = arith.muli %arg0, %c4_i32_10 : i32
    %c1_i32 = arith.constant 1 : i32
    %21 = arith.addi %20, %c1_i32 : i32
    %c32_i32_11 = arith.constant 32 : i32
    %22 = arith.muli %21, %c32_i32_11 : i32
    %23 = tpu.assume_multiple %22, 8 : i32
    %24 = arith.index_cast %23 : i32 to index
    %c0_12 = arith.constant 0 : index
    %25 = vector.load %arg5[%24, %c0_12] : memref<176x128xf32, #tpu.memory_space<vmem>>, vector<56x128xf32>
    %cst_13 = arith.constant dense<0.000000e+00> : vector<11x128xf32>
    %26 = tpu.matmul %3, %25, %cst_13 {dimension_numbers = #tpu.dot_dimension_numbers<[1], [0], [0], [1], [0, 0, 1, 1], [], []>} : vector<11x56xf32>, vector<56x128xf32>, vector<11x128xf32> -> vector<11x128xf32>
    %27 = arith.addf %26, %6 : vector<11x128xf32>
    %cst_14 = arith.constant 0.000000e+00 : f32
    %28 = vector.broadcast %cst_14 : f32 to vector<11x128xf32>
    %29 = arith.maximumf %27, %28 : vector<11x128xf32>
    %c1 = arith.constant 1 : index
    %c0_15 = arith.constant 0 : index
    %c0_16 = arith.constant 0 : index
    %30 = vector.load %arg4[%c1, %c0_15, %c0_16] : memref<4x11x128xf32, #tpu.memory_space<vmem>>, vector<1x11x128xf32>
    %31 = vector.shape_cast %30 : vector<1x11x128xf32> to vector<11x128xf32>
    %32 = vector.shape_cast %29 : vector<11x128xf32> to vector<1x11x128xf32>
    tpu.vector_store %arg4[%c1, %c0_15, %c0_16], %32 {strides = array<i32>} : memref<4x11x128xf32, #tpu.memory_space<vmem>>, vector<1x11x128xf32>,
    %c4_i32_17 = arith.constant 4 : i32
    %33 = arith.muli %arg0, %c4_i32_17 : i32
    %c2_i32 = arith.constant 2 : i32
    %34 = arith.addi %33, %c2_i32 : i32
    %c32_i32_18 = arith.constant 32 : i32
    %35 = arith.muli %34, %c32_i32_18 : i32
    %36 = tpu.assume_multiple %35, 8 : i32
    %37 = arith.index_cast %36 : i32 to index
    %c0_19 = arith.constant 0 : index
    %38 = vector.load %arg5[%37, %c0_19] : memref<176x128xf32, #tpu.memory_space<vmem>>, vector<56x128xf32>
    %cst_20 = arith.constant dense<0.000000e+00> : vector<11x128xf32>
    %39 = tpu.matmul %3, %38, %cst_20 {dimension_numbers = #tpu.dot_dimension_numbers<[1], [0], [0], [1], [0, 0, 1, 1], [], []>} : vector<11x56xf32>, vector<56x128xf32>, vector<11x128xf32> -> vector<11x128xf32>
    %40 = arith.addf %39, %6 : vector<11x128xf32>
    %cst_21 = arith.constant 0.000000e+00 : f32
    %41 = vector.broadcast %cst_21 : f32 to vector<11x128xf32>
    %42 = arith.maximumf %40, %41 : vector<11x128xf32>
    %c2 = arith.constant 2 : index
    %c0_22 = arith.constant 0 : index
    %c0_23 = arith.constant 0 : index
    %43 = vector.load %arg4[%c2, %c0_22, %c0_23] : memref<4x11x128xf32, #tpu.memory_space<vmem>>, vector<1x11x128xf32>
    %44 = vector.shape_cast %43 : vector<1x11x128xf32> to vector<11x128xf32>
    %45 = vector.shape_cast %42 : vector<11x128xf32> to vector<1x11x128xf32>
    tpu.vector_store %arg4[%c2, %c0_22, %c0_23], %45 {strides = array<i32>} : memref<4x11x128xf32, #tpu.memory_space<vmem>>, vector<1x11x128xf32>,
    %c4_i32_24 = arith.constant 4 : i32
    %46 = arith.muli %arg0, %c4_i32_24 : i32
    %c3_i32 = arith.constant 3 : i32
    %47 = arith.addi %46, %c3_i32 : i32
    %c32_i32_25 = arith.constant 32 : i32
    %48 = arith.muli %47, %c32_i32_25 : i32
    %49 = tpu.assume_multiple %48, 8 : i32
    %50 = arith.index_cast %49 : i32 to index
    %c0_26 = arith.constant 0 : index
    %51 = vector.load %arg5[%50, %c0_26] : memref<176x128xf32, #tpu.memory_space<vmem>>, vector<56x128xf32>
    %cst_27 = arith.constant dense<0.000000e+00> : vector<11x128xf32>
    %52 = tpu.matmul %3, %51, %cst_27 {dimension_numbers = #tpu.dot_dimension_numbers<[1], [0], [0], [1], [0, 0, 1, 1], [], []>} : vector<11x56xf32>, vector<56x128xf32>, vector<11x128xf32> -> vector<11x128xf32>
    %53 = arith.addf %52, %6 : vector<11x128xf32>
    %cst_28 = arith.constant 0.000000e+00 : f32
    %54 = vector.broadcast %cst_28 : f32 to vector<11x128xf32>
    %55 = arith.maximumf %53, %54 : vector<11x128xf32>
    %c3 = arith.constant 3 : index
    %c0_29 = arith.constant 0 : index
    %c0_30 = arith.constant 0 : index
    %56 = vector.load %arg4[%c3, %c0_29, %c0_30] : memref<4x11x128xf32, #tpu.memory_space<vmem>>, vector<1x11x128xf32>
    %57 = vector.shape_cast %56 : vector<1x11x128xf32> to vector<11x128xf32>
    %58 = vector.shape_cast %55 : vector<11x128xf32> to vector<1x11x128xf32>
    tpu.vector_store %arg4[%c3, %c0_29, %c0_30], %58 {strides = array<i32>} : memref<4x11x128xf32, #tpu.memory_space<vmem>>, vector<1x11x128xf32>,
    return
  }
  func.func @transform_0(%arg0: i32) -> (i32, i32) {
    %c0_i32 = arith.constant 0 : i32
    %c0_i32_0 = arith.constant 0 : i32
    %c0_i32_1 = arith.constant 0 : i32
    return %c0_i32, %c0_i32_0 : i32, i32
  }
  func.func @transform_1(%arg0: i32) -> (i32, i32) {
    %c0_i32 = arith.constant 0 : i32
    %c0_i32_0 = arith.constant 0 : i32
    %c0_i32_1 = arith.constant 0 : i32
    return %c0_i32, %c0_i32_0 : i32, i32
  }
  func.func @transform_2(%arg0: i32) -> (i32, i32) {
    %c0_i32 = arith.constant 0 : i32
    %c0_i32_0 = arith.constant 0 : i32
    %c0_i32_1 = arith.constant 0 : i32
    return %c0_i32, %c0_i32_0 : i32, i32
  }
  func.func @transform_3(%arg0: i32) -> (i32, i32, i32) {
    %c0_i32 = arith.constant 0 : i32
    %c0_i32_0 = arith.constant 0 : i32
    %c0_i32_1 = arith.constant 0 : i32
    return %arg0, %c0_i32, %c0_i32_0 : i32, i32, i32
  }
}

</mosaic_0001>

<llo_original>
// kernel: conv2d_bn_relu.1
$region0: #{conv2d_bn_relu.1}
  #allocation0 [shape = 'u32[]', space=smem, size = 0x4, offset = 0x4, fixed_abs, tag = 'smem constant byte address 0x4 - core index']
  #allocation1 [shape = 'u32[144,128]{1,0:T(1,128)}', space=vmem, size = 0x12000, scoped, tag = 'internal scratch']
  #allocation2 [shape = 'f32[176,128]{1,0:T(8,128)}', space=vmem, size = 0x16000, scoped, tag = 'scratch operand']
  %s0 = inlined_call_operand.vmem [shape: f32[128,128], index: 0, kind: input, shape index: {}]
  %s1 = inlined_call_operand.vmem [shape: f32[11,56], index: 1, kind: input, shape index: {}]
  %s2 = inlined_call_operand.vmem [shape: f32[11,1], index: 2, kind: input, shape index: {}]
  %s3 = inlined_call_operand.vmem [shape: f32[4,11,128], index: 3, kind: output, shape index: {}]
  %s4 = sld [smem:[#allocation0]]
  $region26: #{conv2d_bn_relu.1} parent=0
    _
  %s6 = ssub.s32 1, %s4
  %s7 = scalar_select 0, %s6, %s4
  // Predicated region
  $region2: #{conv2d_bn_relu.1} parent=0 // pred_check
    _
  $region3: #{conv2d_bn_relu.1} parent=0 // pred_check_branch
    %9 = sbr.rel (0) target = $region5
  $region4: #{conv2d_bn_relu.1} parent=0 // pred_region
    _
  $region5: #{conv2d_bn_relu.1} parent=0 // pred_fallthru
    _
  // Predicated region
  $region6: #{conv2d_bn_relu.1} parent=0 // pred_check
    _
  $region7: #{conv2d_bn_relu.1} parent=0 // pred_check_branch
    %11 = sbr.rel (0) target = $region9
  $region8: #{conv2d_bn_relu.1} parent=0 // pred_region
    _
  $region9: #{conv2d_bn_relu.1} parent=0 // pred_fallthru
    _
  // Predicated region
  $region10: #{conv2d_bn_relu.1} parent=0 // pred_check
    _
  $region11: #{conv2d_bn_relu.1} parent=0 // pred_check_branch
    %13 = sbr.rel (0) target = $region13
  $region12: #{conv2d_bn_relu.1} parent=0 // pred_region
    _
  $region13: #{conv2d_bn_relu.1} parent=0 // pred_fallthru
    _
  %p14 = scmp.eq.s32.totalorder 0, 0
  // Predicated region
  $region14: #{conv2d_bn_relu.1} parent=0 // pred_check
    %p15 = pneg %p14
  $region15: #{conv2d_bn_relu.1} parent=0 // pred_check_branch
    %17 = sbr.rel (%p15) target = $region17
  $region16: #{conv2d_bn_relu.1} parent=0 // pred_region
    %18 = vst [vmem:[#allocation2] sm:$0xff] 0.0
    %19 = vst [vmem:[#allocation2 + $0x8] sm:$0xff] 0.0
    %20 = vst [vmem:[#allocation2 + $0x10] sm:$0xff] 0.0
    %21 = vst [vmem:[#allocation2 + $0x98] sm:$0xff] 0.0
    %22 = vst [vmem:[#allocation2 + $0xa0] sm:$0xff] 0.0
    %23 = vst [vmem:[#allocation2 + $0xa8] sm:$0xff] 0.0
    %v24 = vld [vmem:[%s0] sm:$0xff]
    %v25 = vld [vmem:[%s0 + $0x8] sm:$0xff]
    %v26 = vld [vmem:[%s0 + $0x10] sm:$0xff]
    %v27 = vld [vmem:[%s0 + $0x18] sm:$0xff]
    %v28 = vld [vmem:[%s0 + $0x20] sm:$0xff]
    %v29 = vld [vmem:[%s0 + $0x28] sm:$0xff]
    %v30 = vld [vmem:[%s0 + $0x30] sm:$0xff]
    %v31 = vld [vmem:[%s0 + $0x38] sm:$0xff]
    %v32 = vld [vmem:[%s0 + $0x40] sm:$0xff]
    %v33 = vld [vmem:[%s0 + $0x48] sm:$0xff]
    %v34 = vld [vmem:[%s0 + $0x50] sm:$0xff]
    %v35 = vld [vmem:[%s0 + $0x58] sm:$0xff]
    %v36 = vld [vmem:[%s0 + $0x60] sm:$0xff]
    %v37 = vld [vmem:[%s0 + $0x68] sm:$0xff]
    %v38 = vld [vmem:[%s0 + $0x70] sm:$0xff]
    %v39 = vld [vmem:[%s0 + $0x78] sm:$0xff]
    %40 = vst [vmem:[#allocation2 + $0x18] sm:$0xff] %v24
    %41 = vst [vmem:[#allocation2 + $0x20] sm:$0xff] %v25
    %42 = vst [vmem:[#allocation2 + $0x28] sm:$0xff] %v26
    %43 = vst [vmem:[#allocation2 + $0x30] sm:$0xff] %v27
    %44 = vst [vmem:[#allocation2 + $0x38] sm:$0xff] %v28
    %45 = vst [vmem:[#allocation2 + $0x40] sm:$0xff] %v29
    %46 = vst [vmem:[#allocation2 + $0x48] sm:$0xff] %v30
    %47 = vst [vmem:[#allocation2 + $0x50] sm:$0xff] %v31
    %48 = vst [vmem:[#allocation2 + $0x58] sm:$0xff] %v32
    %49 = vst [vmem:[#allocation2 + $0x60] sm:$0xff] %v33
    %50 = vst [vmem:[#allocation2 + $0x68] sm:$0xff] %v34
    %51 = vst [vmem:[#allocation2 + $0x70] sm:$0xff] %v35
    %52 = vst [vmem:[#allocation2 + $0x78] sm:$0xff] %v36
    %53 = vst [vmem:[#allocation2 + $0x80] sm:$0xff] %v37
    %54 = vst [vmem:[#allocation2 + $0x88] sm:$0xff] %v38
    %55 = vst [vmem:[#allocation2 + $0x90] sm:$0xff] %v39
  $region17: #{conv2d_bn_relu.1} parent=0 // pred_fallthru
    _
  %v56 = vld [vmem:[%s1] sm:$0xff]
  %v57 = vld [vmem:[%s1 + $0x8] sm:$0x7]
  %v58 = vld [vmem:[%s2] sm:$0xff]
  %v59 = vld [vmem:[%s2 + $0x8] sm:$0x7]
  %61 = vset.pattern.permute.xlu0 0
  %62 = vperm.xlu0 %61, %v58
  %v63 = vpop.permute.xlu0 %62
  %66 = vset.pattern.permute.xlu0 0
  %67 = vperm.xlu0 %66, %v59
  %v68 = vpop.permute.xlu0 %67
  %s70 = smul.u32 0, 128
  %s71 = scalar_lea.vmem [#allocation2], %s70
  %v72 = vld [vmem:[%s71] sm:$0xff]
  %v73 = vld [vmem:[%s71 + $0x8] sm:$0xff]
  %v74 = vld [vmem:[%s71 + $0x10] sm:$0xff]
  %v75 = vld [vmem:[%s71 + $0x18] sm:$0xff]
  %v76 = vld [vmem:[%s71 + $0x20] sm:$0xff]
  %v77 = vld [vmem:[%s71 + $0x28] sm:$0xff]
  %v78 = vld [vmem:[%s71 + $0x30] sm:$0xff]
  %vm79 = vcmask 457728
  %v81 = vsel %vm79, %v56, 0
  %v84 = vsel %vm79, %v57, 0
  %86 = vmatprep.subr.mxu0 0.0
  %87 = vmatpush1.msra.mxu0 0.0
  %88 = vmatprep.subr.mxu0 0.0
  %89 = vmatpush1.msra.mxu0 0.0
  %90 = vmatprep.subr.mxu0 0.0
  %91 = vmatpush1.msra.mxu0 0.0
  %92 = vmatprep.subr.mxu0 0.0
  %93 = vmatpush1.msra.mxu0 0.0
  %94 = vmatprep.subr.mxu0 0.0
  %95 = vmatpush1.msra.mxu0 0.0
  %96 = vmatprep.subr.mxu0 0.0
  %97 = vmatpush1.msra.mxu0 0.0
  %98 = vmatprep.subr.mxu0 0.0
  %99 = vmatpush1.msra.mxu0 0.0
  %100 = vmatprep.subr.mxu0 0.0
  %101 = vmatpush1.msra.mxu0 0.0
  %102 = vmatprep.subr.mxu0 0.0
  %103 = vmatpush1.msra.mxu0 0.0
  %104 = vmatprep.subr.mxu0 0.0
  %105 = vmatpush1.msra.mxu0 %v78
  %106 = vmatprep.subr.mxu0 0.0
  %107 = vmatpush1.msra.mxu0 %v77
  %108 = vmatprep.subr.mxu0 0.0
  %109 = vmatpush1.msra.mxu0 %v76
  %110 = vmatprep.subr.mxu0 0.0
  %111 = vmatpush1.msra.mxu0 %v75
  %112 = vmatprep.subr.mxu0 0.0
  %113 = vmatpush1.msra.mxu0 %v74
  %114 = vmatprep.subr.mxu0 0.0
  %115 = vmatpush1.msra.mxu0 %v73
  %116 = vmatprep.subr.mxu0 0.0
  %117 = vmatpush1.msra.mxu0 %v72
  %118 = vmatprep.subr.mxu0 0.0
  %119 = vmatpush2.msra.mxu0 0.0
  %120 = vmatprep.subr.mxu0 0.0
  %121 = vmatpush2.msra.mxu0 0.0
  %122 = vmatprep.subr.mxu0 0.0
  %123 = vmatpush2.msra.mxu0 0.0
  %124 = vmatprep.subr.mxu0 0.0
  %125 = vmatpush2.msra.mxu0 0.0
  %126 = vmatprep.subr.mxu0 0.0
  %127 = vmatpush2.msra.mxu0 0.0
  %128 = vmatprep.subr.mxu0 0.0
  %129 = vmatpush2.msra.mxu0 0.0
  %130 = vmatprep.subr.mxu0 0.0
  %131 = vmatpush2.msra.mxu0 0.0
  %132 = vmatprep.subr.mxu0 0.0
  %133 = vmatpush2.msra.mxu0 0.0
  %134 = vmatprep.subr.mxu0 0.0
  %135 = vmatpush2.msra.mxu0 0.0
  %136 = vmatprep.subr.mxu0 0.0
  %137 = vmatpush2.msra.mxu0 0.0
  %138 = vmatprep.subr.mxu0 0.0
  %139 = vmatpush2.msra.mxu0 0.0
  %140 = vmatprep.subr.mxu0 0.0
  %141 = vmatpush2.msra.mxu0 0.0
  %142 = vmatprep.subr.mxu0 0.0
  %143 = vmatpush2.msra.mxu0 0.0
  %144 = vmatprep.subr.mxu0 0.0
  %145 = vmatpush2.msra.mxu0 0.0
  %146 = vmatprep.subr.mxu0 0.0
  %147 = vmatpush2.msra.mxu0 0.0
  %148 = vmatprep.subr.mxu0 0.0
  %149 = vmatpush2.msra.mxu0 0.0
  %150 = vmatprep.mubr.f32.mxu0 0.0
  %151 = vmatmul.mubr.f32.gmra.mxu0 %v81
  %v152 = vpop.f32.mrf.mxu0
  %v153 = vadd.f32 %v63, %v152
  %v154 = vpop.f32.mrf.mxu0
  %155 = vmatprep.mubr.f32.mxu0 0.0
  %156 = vmatmul.mubr.f32.gmra.mxu0 %v84
  %v157 = vpop.f32.mrf.mxu0
  %v158 = vadd.f32 %v68, %v157
  %v159 = vpop.f32.mrf.mxu0
  %160 = vdwg.mxu0
  %v161 = vmax.f32 %v153, 0.0
  %v162 = vmax.f32 %v158, 0.0
  %163 = vst [vmem:[%s3] sm:$0xff] %v161
  %164 = vst [vmem:[%s3 + $0x8] sm:$0x7] %v162
  %s165 = smul.u32 0, 4
  %s166 = sadd.s32 %s165, 1
  %s167 = smul.u32 %s166, 32
  %s168 = scalar_lea.vmem [#allocation2], %s167
  %v169 = vld [vmem:[%s168] sm:$0xff]
  %v170 = vld [vmem:[%s168 + $0x8] sm:$0xff]
  %v171 = vld [vmem:[%s168 + $0x10] sm:$0xff]
  %v172 = vld [vmem:[%s168 + $0x18] sm:$0xff]
  %v173 = vld [vmem:[%s168 + $0x20] sm:$0xff]
  %v174 = vld [vmem:[%s168 + $0x28] sm:$0xff]
  %v175 = vld [vmem:[%s168 + $0x30] sm:$0xff]
  %176 = vmatprep.subr.mxu0 0.0
  %177 = vmatpush1.msra.mxu0 0.0
  %178 = vmatprep.subr.mxu0 0.0
  %179 = vmatpush1.msra.mxu0 0.0
  %180 = vmatprep.subr.mxu0 0.0
  %181 = vmatpush1.msra.mxu0 0.0
  %182 = vmatprep.subr.mxu0 0.0
  %183 = vmatpush1.msra.mxu0 0.0
  %184 = vmatprep.subr.mxu0 0.0
  %185 = vmatpush1.msra.mxu0 0.0
  %186 = vmatprep.subr.mxu0 0.0
  %187 = vmatpush1.msra.mxu0 0.0
  %188 = vmatprep.subr.mxu0 0.0
  %189 = vmatpush1.msra.mxu0 0.0
  %190 = vmatprep.subr.mxu0 0.0
  %191 = vmatpush1.msra.mxu0 0.0
  %192 = vmatprep.subr.mxu0 0.0
  %193 = vmatpush1.msra.mxu0 0.0
  %194 = vmatprep.subr.mxu0 0.0
  %195 = vmatpush1.msra.mxu0 %v175
  %196 = vmatprep.subr.mxu0 0.0
  %197 = vmatpush1.msra.mxu0 %v174
  %198 = vmatprep.subr.mxu0 0.0
  %199 = vmatpush1.msra.mxu0 %v173
  %200 = vmatprep.subr.mxu0 0.0
  %201 = vmatpush1.msra.mxu0 %v172
  %202 = vmatprep.subr.mxu0 0.0
  %203 = vmatpush1.msra.mxu0 %v171
  %204 = vmatprep.subr.mxu0 0.0
  %205 = vmatpush1.msra.mxu0 %v170
  %206 = vmatprep.subr.mxu0 0.0
  %207 = vmatpush1.msra.mxu0 %v169
  %208 = vmatprep.subr.mxu0 0.0
  %209 = vmatpush2.msra.mxu0 0.0
  %210 = vmatprep.subr.mxu0 0.0
  %211 = vmatpush2.msra.mxu0 0.0
  %212 = vmatprep.subr.mxu0 0.0
  %213 = vmatpush2.msra.mxu0 0.0
  %214 = vmatprep.subr.mxu0 0.0
  %215 = vmatpush2.msra.mxu0 0.0
  %216 = vmatprep.subr.mxu0 0.0
  %217 = vmatpush2.msra.mxu0 0.0
  %218 = vmatprep.subr.mxu0 0.0
  %219 = vmatpush2.msra.mxu0 0.0
  %220 = vmatprep.subr.mxu0 0.0
  %221 = vmatpush2.msra.mxu0 0.0
  %222 = vmatprep.subr.mxu0 0.0
  %223 = vmatpush2.msra.mxu0 0.0
  %224 = vmatprep.subr.mxu0 0.0
  %225 = vmatpush2.msra.mxu0 0.0
  %226 = vmatprep.subr.mxu0 0.0
  %227 = vmatpush2.msra.mxu0 0.0
  %228 = vmatprep.subr.mxu0 0.0
  %229 = vmatpush2.msra.mxu0 0.0
  %230 = vmatprep.subr.mxu0 0.0
  %231 = vmatpush2.msra.mxu0 0.0
  %232 = vmatprep.subr.mxu0 0.0
  %233 = vmatpush2.msra.mxu0 0.0
  %234 = vmatprep.subr.mxu0 0.0
  %235 = vmatpush2.msra.mxu0 0.0
  %236 = vmatprep.subr.mxu0 0.0
  %237 = vmatpush2.msra.mxu0 0.0
  %238 = vmatprep.subr.mxu0 0.0
  %239 = vmatpush2.msra.mxu0 0.0
  %240 = vmatprep.mubr.f32.mxu0 0.0
  %241 = vmatmul.mubr.f32.gmra.mxu0 %v81
  %v242 = vpop.f32.mrf.mxu0
  %v243 = vadd.f32 %v63, %v242
  %v244 = vpop.f32.mrf.mxu0
  %245 = vmatprep.mubr.f32.mxu0 0.0
  %246 = vmatmul.mubr.f32.gmra.mxu0 %v84
  %v247 = vpop.f32.mrf.mxu0
  %v248 = vadd.f32 %v68, %v247
  %v249 = vpop.f32.mrf.mxu0
  %250 = vdwg.mxu0
  %v251 = vmax.f32 %v243, 0.0
  %v252 = vmax.f32 %v248, 0.0
  %s253 = scalar_lea.vmem %s3, 16
  %254 = vst [vmem:[%s253] sm:$0xff] %v251
  %255 = vst [vmem:[%s253 + $0x8] sm:$0x7] %v252
  %s256 = sadd.s32 %s165, 2
  %s257 = smul.u32 %s256, 32
  %s258 = scalar_lea.vmem [#allocation2], %s257
  %v259 = vld [vmem:[%s258] sm:$0xff]
  %v260 = vld [vmem:[%s258 + $0x8] sm:$0xff]
  %v261 = vld [vmem:[%s258 + $0x10] sm:$0xff]
  %v262 = vld [vmem:[%s258 + $0x18] sm:$0xff]
  %v263 = vld [vmem:[%s258 + $0x20] sm:$0xff]
  %v264 = vld [vmem:[%s258 + $0x28] sm:$0xff]
  %v265 = vld [vmem:[%s258 + $0x30] sm:$0xff]
  %266 = vmatprep.subr.mxu0 0.0
  %267 = vmatpush1.msra.mxu0 0.0
  %268 = vmatprep.subr.mxu0 0.0
  %269 = vmatpush1.msra.mxu0 0.0
  %270 = vmatprep.subr.mxu0 0.0
  %271 = vmatpush1.msra.mxu0 0.0
  %272 = vmatprep.subr.mxu0 0.0
  %273 = vmatpush1.msra.mxu0 0.0
  %274 = vmatprep.subr.mxu0 0.0
  %275 = vmatpush1.msra.mxu0 0.0
  %276 = vmatprep.subr.mxu0 0.0
  %277 = vmatpush1.msra.mxu0 0.0
  %278 = vmatprep.subr.mxu0 0.0
  %279 = vmatpush1.msra.mxu0 0.0
  %280 = vmatprep.subr.mxu0 0.0
  %281 = vmatpush1.msra.mxu0 0.0
  %282 = vmatprep.subr.mxu0 0.0
  %283 = vmatpush1.msra.mxu0 0.0
  %284 = vmatprep.subr.mxu0 0.0
  %285 = vmatpush1.msra.mxu0 %v265
  %286 = vmatprep.subr.mxu0 0.0
  %287 = vmatpush1.msra.mxu0 %v264
  %288 = vmatprep.subr.mxu0 0.0
  %289 = vmatpush1.msra.mxu0 %v263
  %290 = vmatprep.subr.mxu0 0.0
  %291 = vmatpush1.msra.mxu0 %v262
  %292 = vmatprep.subr.mxu0 0.0
  %293 = vmatpush1.msra.mxu0 %v261
  %294 = vmatprep.subr.mxu0 0.0
  %295 = vmatpush1.msra.mxu0 %v260
  %296 = vmatprep.subr.mxu0 0.0
  %297 = vmatpush1.msra.mxu0 %v259
  %298 = vmatprep.subr.mxu0 0.0
  %299 = vmatpush2.msra.mxu0 0.0
  %300 = vmatprep.subr.mxu0 0.0
  %301 = vmatpush2.msra.mxu0 0.0
  %302 = vmatprep.subr.mxu0 0.0
  %303 = vmatpush2.msra.mxu0 0.0
  %304 = vmatprep.subr.mxu0 0.0
  %305 = vmatpush2.msra.mxu0 0.0
  %306 = vmatprep.subr.mxu0 0.0
  %307 = vmatpush2.msra.mxu0 0.0
  %308 = vmatprep.subr.mxu0 0.0
  %309 = vmatpush2.msra.mxu0 0.0
  %310 = vmatprep.subr.mxu0 0.0
  %311 = vmatpush2.msra.mxu0 0.0
  %312 = vmatprep.subr.mxu0 0.0
  %313 = vmatpush2.msra.mxu0 0.0
  %314 = vmatprep.subr.mxu0 0.0
  %315 = vmatpush2.msra.mxu0 0.0
  %316 = vmatprep.subr.mxu0 0.0
  %317 = vmatpush2.msra.mxu0 0.0
  %318 = vmatprep.subr.mxu0 0.0
  %319 = vmatpush2.msra.mxu0 0.0
  %320 = vmatprep.subr.mxu0 0.0
  %321 = vmatpush2.msra.mxu0 0.0
  %322 = vmatprep.subr.mxu0 0.0
  %323 = vmatpush2.msra.mxu0 0.0
  %324 = vmatprep.subr.mxu0 0.0
  %325 = vmatpush2.msra.mxu0 0.0
  %326 = vmatprep.subr.mxu0 0.0
  %327 = vmatpush2.msra.mxu0 0.0
  %328 = vmatprep.subr.mxu0 0.0
  %329 = vmatpush2.msra.mxu0 0.0
  %330 = vmatprep.mubr.f32.mxu0 0.0
  %331 = vmatmul.mubr.f32.gmra.mxu0 %v81
  %v332 = vpop.f32.mrf.mxu0
  %v333 = vadd.f32 %v63, %v332
  %v334 = vpop.f32.mrf.mxu0
  %335 = vmatprep.mubr.f32.mxu0 0.0
  %336 = vmatmul.mubr.f32.gmra.mxu0 %v84
  %v337 = vpop.f32.mrf.mxu0
  %v338 = vadd.f32 %v68, %v337
  %v339 = vpop.f32.mrf.mxu0
  %340 = vdwg.mxu0
  %v341 = vmax.f32 %v333, 0.0
  %v342 = vmax.f32 %v338, 0.0
  %s343 = scalar_lea.vmem %s3, 32
  %344 = vst [vmem:[%s343] sm:$0xff] %v341
  %345 = vst [vmem:[%s343 + $0x8] sm:$0x7] %v342
  %s346 = sadd.s32 %s165, 3
  %s347 = smul.u32 %s346, 32
  %s348 = scalar_lea.vmem [#allocation2], %s347
  %v349 = vld [vmem:[%s348] sm:$0xff]
  %v350 = vld [vmem:[%s348 + $0x8] sm:$0xff]
  %v351 = vld [vmem:[%s348 + $0x10] sm:$0xff]
  %v352 = vld [vmem:[%s348 + $0x18] sm:$0xff]
  %v353 = vld [vmem:[%s348 + $0x20] sm:$0xff]
  %v354 = vld [vmem:[%s348 + $0x28] sm:$0xff]
  %v355 = vld [vmem:[%s348 + $0x30] sm:$0xff]
  %356 = vmatprep.subr.mxu0 0.0
  %357 = vmatpush1.msra.mxu0 0.0
  %358 = vmatprep.subr.mxu0 0.0
  %359 = vmatpush1.msra.mxu0 0.0
  %360 = vmatprep.subr.mxu0 0.0
  %361 = vmatpush1.msra.mxu0 0.0
  %362 = vmatprep.subr.mxu0 0.0
  %363 = vmatpush1.msra.mxu0 0.0
  %364 = vmatprep.subr.mxu0 0.0
  %365 = vmatpush1.msra.mxu0 0.0
  %366 = vmatprep.subr.mxu0 0.0
  %367 = vmatpush1.msra.mxu0 0.0
  %368 = vmatprep.subr.mxu0 0.0
  %369 = vmatpush1.msra.mxu0 0.0
  %370 = vmatprep.subr.mxu0 0.0
  %371 = vmatpush1.msra.mxu0 0.0
  %372 = vmatprep.subr.mxu0 0.0
  %373 = vmatpush1.msra.mxu0 0.0
  %374 = vmatprep.subr.mxu0 0.0
  %375 = vmatpush1.msra.mxu0 %v355
  %376 = vmatprep.subr.mxu0 0.0
  %377 = vmatpush1.msra.mxu0 %v354
  %378 = vmatprep.subr.mxu0 0.0
  %379 = vmatpush1.msra.mxu0 %v353
  %380 = vmatprep.subr.mxu0 0.0
  %381 = vmatpush1.msra.mxu0 %v352
  %382 = vmatprep.subr.mxu0 0.0
  %383 = vmatpush1.msra.mxu0 %v351
  %384 = vmatprep.subr.mxu0 0.0
  %385 = vmatpush1.msra.mxu0 %v350
  %386 = vmatprep.subr.mxu0 0.0
  %387 = vmatpush1.msra.mxu0 %v349
  %388 = vmatprep.subr.mxu0 0.0
  %389 = vmatpush2.msra.mxu0 0.0
  %390 = vmatprep.subr.mxu0 0.0
  %391 = vmatpush2.msra.mxu0 0.0
  %392 = vmatprep.subr.mxu0 0.0
  %393 = vmatpush2.msra.mxu0 0.0
  %394 = vmatprep.subr.mxu0 0.0
  %395 = vmatpush2.msra.mxu0 0.0
  %396 = vmatprep.subr.mxu0 0.0
  %397 = vmatpush2.msra.mxu0 0.0
  %398 = vmatprep.subr.mxu0 0.0
  %399 = vmatpush2.msra.mxu0 0.0
  %400 = vmatprep.subr.mxu0 0.0
  %401 = vmatpush2.msra.mxu0 0.0
  %402 = vmatprep.subr.mxu0 0.0
  %403 = vmatpush2.msra.mxu0 0.0
  %404 = vmatprep.subr.mxu0 0.0
  %405 = vmatpush2.msra.mxu0 0.0
  %406 = vmatprep.subr.mxu0 0.0
  %407 = vmatpush2.msra.mxu0 0.0
  %408 = vmatprep.subr.mxu0 0.0
  %409 = vmatpush2.msra.mxu0 0.0
  %410 = vmatprep.subr.mxu0 0.0
  %411 = vmatpush2.msra.mxu0 0.0
  %412 = vmatprep.subr.mxu0 0.0
  %413 = vmatpush2.msra.mxu0 0.0
  %414 = vmatprep.subr.mxu0 0.0
  %415 = vmatpush2.msra.mxu0 0.0
  %416 = vmatprep.subr.mxu0 0.0
  %417 = vmatpush2.msra.mxu0 0.0
  %418 = vmatprep.subr.mxu0 0.0
  %419 = vmatpush2.msra.mxu0 0.0
  %420 = vmatprep.mubr.f32.mxu0 0.0
  %421 = vmatmul.mubr.f32.gmra.mxu0 %v81
  %v422 = vpop.f32.mrf.mxu0
  %v423 = vadd.f32 %v63, %v422
  %v424 = vpop.f32.mrf.mxu0
  %425 = vmatprep.mubr.f32.mxu0 0.0
  %426 = vmatmul.mubr.f32.gmra.mxu0 %v84
  %v427 = vpop.f32.mrf.mxu0
  %v428 = vadd.f32 %v68, %v427
  %v429 = vpop.f32.mrf.mxu0
  %430 = vdwg.mxu0
  %v431 = vmax.f32 %v423, 0.0
  %v432 = vmax.f32 %v428, 0.0
  %s433 = scalar_lea.vmem %s3, 48
  %434 = vst [vmem:[%s433] sm:$0xff] %v431
  %435 = vst [vmem:[%s433 + $0x8] sm:$0x7] %v432
  // Predicated region
  $region18: #{conv2d_bn_relu.1} parent=0 // pred_check
    _
  $region19: #{conv2d_bn_relu.1} parent=0 // pred_check_branch
    %437 = sbr.rel (0) target = $region21
  $region20: #{conv2d_bn_relu.1} parent=0 // pred_region
    _
  $region21: #{conv2d_bn_relu.1} parent=0 // pred_fallthru
    _
  // Predicated region
  $region22: #{conv2d_bn_relu.1} parent=0 // pred_check
    _
  $region23: #{conv2d_bn_relu.1} parent=0 // pred_check_branch
    %439 = sbr.rel (0) target = $region25
  $region24: #{conv2d_bn_relu.1} parent=0 // pred_region
    _
  $region25: #{conv2d_bn_relu.1} parent=0 // pred_fallthru
    _

</llo_original>
